<compile_context>
chip_gen: v7x
topology: tpu7x:2x2x1
jax: 0.10.0
libtpu: 0.0.40
codegen_flags: <defaults>
</compile_context>

<pallas_src>
import jax
import jax.numpy as jnp
from jax.experimental import pallas as pl
from jax.experimental.pallas import tpu as pltpu

C_IN = 128
C_OUT = 256

_MAX_TILE_HW = 4096            # lane-dense tile cap (f32: ~6 MiB of input / step)
_TARGET_STEP_BYTES = 4 << 20   # fold batch elements until a step moves ~4 MiB
_MAX_BATCH_FOLD = 8


def _round_up(x, m):
    return (x + m - 1) // m * m


def _choose_hw_tiling(hw):
    """Return (padded H*W extent, lane-dense tile size)."""
    hw128 = _round_up(hw, 128)
    if hw128 <= _MAX_TILE_HW:
        return hw128, hw128                        # single spatial tile
    for cand in (4096, 3584, 3072, 2560, 2048, 1536, 1024):
        if hw128 % cand == 0:
            return hw128, cand
    # No large divisor of the 128-padded extent: pad a little further so the
    # per-step DMA stays big (bounded extra zero-work, never tiny tiles).
    return _round_up(hw, 2048), 2048


def _pick_batch_fold(batch, per_batch_step_bytes):
    """Largest divisor of `batch` that gets a step to ~_TARGET_STEP_BYTES."""
    want = max(1, -(-_TARGET_STEP_BYTES // per_batch_step_bytes))
    want = min(want, _MAX_BATCH_FOLD, batch)
    nb = 1
    for d in range(1, want + 1):
        if batch % d == 0:
            nb = d
    return nb


def _fitnet_kernel(x_ref, w_ref, t_ref, o_ref):
    """One (batch-block bb, spatial-tile j) grid step — fully independent.

    x_ref : (nb, C_IN,  tile_hw)  student features (channel-first)
    w_ref : (C_OUT, C_IN)         1x1 conv weight (constant index_map)
    t_ref : (nb, C_OUT, tile_hw)  teacher features
    o_ref : (1, 1, 8, 128)        this step's partial sum (wrapper reads [..,0,0])
    """
    w = w_ref[...]
    nb = x_ref.shape[0]
    total = jnp.float32(0.0)
    for bi in range(nb):  # static unroll; nb <= _MAX_BATCH_FOLD
        # 1x1 conv == MXU matmul with f32 accumulation.
        y = jnp.dot(w, x_ref[bi], preferred_element_type=jnp.float32)
        err = y - t_ref[bi].astype(jnp.float32)
        total = total + jnp.sum(err * err)
    # Broadcast the scalar across the (8, 128) block: unmasked lane-dense
    # store, no iota/compare/select in the epilogue.
    o_ref[0, 0] = jnp.zeros((8, 128), jnp.float32) + total


def criterion_fitnet(feat_S, feat_T, conv_weight):
    """feat_S: (B, 128, H, W), feat_T: (B, 256, H, W), conv_weight: (256, 128, 1, 1)."""
    B, C, H, W = feat_S.shape
    assert C == C_IN and feat_T.shape == (B, C_OUT, H, W)
    HW = H * W
    itemsize = jnp.dtype(feat_S.dtype).itemsize

    hw_pad, tile_hw = _choose_hw_tiling(HW)
    n_hw = hw_pad // tile_hw

    per_batch_step_bytes = (C_IN + C_OUT) * tile_hw * itemsize
    nb = _pick_batch_fold(B, per_batch_step_bytes)
    n_bb = B // nb

    # Channel-first matrices: merging trailing dims is a free reshape; the
    # weight squeeze/cast is 128 KiB. Features keep their native dtype
    # (pass bf16 activations to halve HBM traffic; accumulation stays f32).
    x = feat_S.reshape(B, C_IN, HW)
    t = feat_T.reshape(B, C_OUT, HW)
    w = conv_weight.reshape(C_OUT, C_IN).astype(feat_S.dtype)
    if hw_pad != HW:
        # Zero padding contributes exactly 0 to the squared-error sum.
        x = jnp.pad(x, ((0, 0), (0, 0), (0, hw_pad - HW)))
        t = jnp.pad(t, ((0, 0), (0, 0), (0, hw_pad - HW)))

    # Scoped-VMEM budget: double-buffered inputs + weight + headroom for the
    # compiler-managed (C_OUT, tile_hw) f32 intermediates (y / err / err^2).
    step_in_bytes = nb * per_batch_step_bytes
    vmem_needed = (2 * step_in_bytes
                   + 2 * C_OUT * C_IN * itemsize
                   + 3 * C_OUT * tile_hw * 4
                   + (2 << 20))
    vmem_limit = int(min(96 << 20, max(32 << 20, vmem_needed)))

    cost = pl.CostEstimate(
        flops=int(2 * B * C_OUT * C_IN * hw_pad + 3 * B * C_OUT * hw_pad),
        transcendentals=0,
        bytes_accessed=int(x.size * itemsize + t.size * itemsize
                           + w.size * itemsize + n_bb * n_hw * 8 * 128 * 4),
    )

    partials = pl.pallas_call(
        _fitnet_kernel,
        out_shape=jax.ShapeDtypeStruct((n_bb, n_hw, 8, 128), jnp.float32),
        grid_spec=pltpu.PrefetchScalarGridSpec(
            num_scalar_prefetch=0,
            grid=(n_bb, n_hw),
            in_specs=[
                pl.BlockSpec((nb, C_IN, tile_hw), lambda bb, j: (bb, 0, j)),   # x
                pl.BlockSpec((C_OUT, C_IN), lambda bb, j: (0, 0)),             # weight
                pl.BlockSpec((nb, C_OUT, tile_hw), lambda bb, j: (bb, 0, j)),  # target
            ],
            out_specs=pl.BlockSpec((1, 1, 8, 128), lambda bb, j: (bb, j, 0, 0)),
        ),
        compiler_params=pltpu.CompilerParams(
            dimension_semantics=("parallel", "parallel"),
            vmem_limit_bytes=vmem_limit),
        cost_estimate=cost,
    )(x, w, t)

    inv_count = 1.0 / float(B * C_OUT * H * W)   # true (unpadded) element count
    return jnp.sum(partials[:, :, 0, 0]) * jnp.float32(inv_count)


def _reference(feat_S, feat_T, conv_weight):
    w = conv_weight.reshape(C_OUT, C_IN)
    y = jnp.einsum("bchw,oc->bohw", feat_S, w)
    return jnp.mean((y - feat_T) ** 2)


if __name__ == "__main__":
    key = jax.random.PRNGKey(0)
    k1, k2, k3 = jax.random.split(key, 3)

    B, H, W = 2, 16, 16  # small spatial; channel dims fixed by the module (128 -> 256)
    feat_S = jax.random.normal(k1, (B, C_IN, H, W), dtype=jnp.float32)
    feat_T = jax.random.normal(k2, (B, C_OUT, H, W), dtype=jnp.float32)
    # Deterministic conv weight init (kaiming-ish scale for a 1x1 conv).
    conv_weight = jax.random.normal(k3, (C_OUT, C_IN, 1, 1), dtype=jnp.float32) * (
        1.0 / (C_IN ** 0.5))

    loss = criterion_fitnet(feat_S, feat_T, conv_weight)
    jax.block_until_ready(loss)

    ref = _reference(feat_S, feat_T, conv_weight)
    assert jnp.allclose(loss, ref, rtol=1e-4, atol=1e-5), (loss, ref)
    print("KERNEL_OK")
</pallas_src>

<mosaic_0001>
module attributes {stable_mosaic.version = 11 : i64} {
  func.func @_fitnet_kernel(%arg0: i32, %arg1: i32, %arg2: memref<2x128x256xf32, #tpu.memory_space<vmem>>, %arg3: memref<256x128xf32, #tpu.memory_space<vmem>>, %arg4: memref<2x256x256xf32, #tpu.memory_space<vmem>>, %arg5: memref<1x1x8x128xf32, #tpu.memory_space<vmem>>) attributes {dimension_semantics = [#tpu.dimension_semantics<parallel>, #tpu.dimension_semantics<parallel>], iteration_bounds = array<i64: 1, 1>, scalar_prefetch = 0 : i64, scratch_operands = 0 : i64, tpu.core_type = #tpu.core_type<tc>, window_params = [{transform_indices = @transform_0, window_bounds = array<i64: 2, 128, 256>}, {pipeline_mode = #tpu.pipeline_mode<synchronous>, transform_indices = @transform_1, window_bounds = array<i64: 256, 128>}, {transform_indices = @transform_2, window_bounds = array<i64: 2, 256, 256>}, {transform_indices = @transform_3, window_bounds = array<i64: 1, 1, 8, 128>}]} {
    %c0 = arith.constant 0 : index
    %c0_0 = arith.constant 0 : index
    %0 = vector.load %arg3[%c0, %c0_0] : memref<256x128xf32, #tpu.memory_space<vmem>>, vector<256x128xf32>
    %c0_1 = arith.constant 0 : index
    %c0_2 = arith.constant 0 : index
    %c0_3 = arith.constant 0 : index
    %1 = vector.load %arg2[%c0_1, %c0_2, %c0_3] : memref<2x128x256xf32, #tpu.memory_space<vmem>>, vector<1x128x256xf32>
    %2 = vector.shape_cast %1 : vector<1x128x256xf32> to vector<128x256xf32>
    %cst = arith.constant dense<0.000000e+00> : vector<256x256xf32>
    %3 = tpu.matmul %0, %2, %cst {dimension_numbers = #tpu.dot_dimension_numbers<[1], [0], [0], [1], [0, 0, 1, 1], [], []>} : vector<256x128xf32>, vector<128x256xf32>, vector<256x256xf32> -> vector<256x256xf32>
    %c0_4 = arith.constant 0 : index
    %c0_5 = arith.constant 0 : index
    %c0_6 = arith.constant 0 : index
    %4 = vector.load %arg4[%c0_4, %c0_5, %c0_6] : memref<2x256x256xf32, #tpu.memory_space<vmem>>, vector<1x256x256xf32>
    %5 = vector.shape_cast %4 : vector<1x256x256xf32> to vector<256x256xf32>
    %6 = arith.subf %3, %5 : vector<256x256xf32>
    %7 = arith.mulf %6, %6 : vector<256x256xf32>
    %8 = vector.shape_cast %7 : vector<256x256xf32> to vector<1x256x256xf32>
    %cst_7 = arith.constant dense<0.000000e+00> : vector<1xf32>
    %9 = vector.multi_reduction <add>, %8, %cst_7 [1, 2] : vector<1x256x256xf32> to vector<1xf32>
    %10 = vector.shape_cast %9 : vector<1xf32> to vector<1x1x1xf32>
    %11 = vector.extract %10[0, 0, 0] : f32 from vector<1x1x1xf32>
    %cst_8 = arith.constant 0.000000e+00 : f32
    %12 = arith.addf %cst_8, %11 : f32
    %c1 = arith.constant 1 : index
    %c0_9 = arith.constant 0 : index
    %c0_10 = arith.constant 0 : index
    %13 = vector.load %arg2[%c1, %c0_9, %c0_10] : memref<2x128x256xf32, #tpu.memory_space<vmem>>, vector<1x128x256xf32>
    %14 = vector.shape_cast %13 : vector<1x128x256xf32> to vector<128x256xf32>
    %cst_11 = arith.constant dense<0.000000e+00> : vector<256x256xf32>
    %15 = tpu.matmul %0, %14, %cst_11 {dimension_numbers = #tpu.dot_dimension_numbers<[1], [0], [0], [1], [0, 0, 1, 1], [], []>} : vector<256x128xf32>, vector<128x256xf32>, vector<256x256xf32> -> vector<256x256xf32>
    %c1_12 = arith.constant 1 : index
    %c0_13 = arith.constant 0 : index
    %c0_14 = arith.constant 0 : index
    %16 = vector.load %arg4[%c1_12, %c0_13, %c0_14] : memref<2x256x256xf32, #tpu.memory_space<vmem>>, vector<1x256x256xf32>
    %17 = vector.shape_cast %16 : vector<1x256x256xf32> to vector<256x256xf32>
    %18 = arith.subf %15, %17 : vector<256x256xf32>
    %19 = arith.mulf %18, %18 : vector<256x256xf32>
    %20 = vector.shape_cast %19 : vector<256x256xf32> to vector<1x256x256xf32>
    %cst_15 = arith.constant dense<0.000000e+00> : vector<1xf32>
    %21 = vector.multi_reduction <add>, %20, %cst_15 [1, 2] : vector<1x256x256xf32> to vector<1xf32>
    %22 = vector.shape_cast %21 : vector<1xf32> to vector<1x1x1xf32>
    %23 = vector.extract %22[0, 0, 0] : f32 from vector<1x1x1xf32>
    %24 = arith.addf %12, %23 : f32
    %cst_16 = arith.constant 0.000000e+00 : f32
    %25 = vector.broadcast %cst_16 : f32 to vector<8x128xf32>
    %26 = vector.broadcast %24 : f32 to vector<8x128xf32>
    %27 = arith.addf %25, %26 : vector<8x128xf32>
    %c0_17 = arith.constant 0 : index
    %c0_18 = arith.constant 0 : index
    %c0_19 = arith.constant 0 : index
    %c0_20 = arith.constant 0 : index
    %28 = vector.load %arg5[%c0_17, %c0_18, %c0_19, %c0_20] : memref<1x1x8x128xf32, #tpu.memory_space<vmem>>, vector<1x1x8x128xf32>
    %29 = vector.shape_cast %28 : vector<1x1x8x128xf32> to vector<8x128xf32>
    %30 = vector.shape_cast %27 : vector<8x128xf32> to vector<1x1x8x128xf32>
    tpu.vector_store %arg5[%c0_17, %c0_18, %c0_19, %c0_20], %30 {strides = array<i32>} : memref<1x1x8x128xf32, #tpu.memory_space<vmem>>, vector<1x1x8x128xf32>,
    return
  }
  func.func @transform_0(%arg0: i32, %arg1: i32) -> (i32, i32, i32) {
    %c0_i32 = arith.constant 0 : i32
    %c0_i32_0 = arith.constant 0 : i32
    return %arg0, %c0_i32, %arg1 : i32, i32, i32
  }
  func.func @transform_1(%arg0: i32, %arg1: i32) -> (i32, i32) {
    %c0_i32 = arith.constant 0 : i32
    %c0_i32_0 = arith.constant 0 : i32
    %c0_i32_1 = arith.constant 0 : i32
    return %c0_i32, %c0_i32_0 : i32, i32
  }
  func.func @transform_2(%arg0: i32, %arg1: i32) -> (i32, i32, i32) {
    %c0_i32 = arith.constant 0 : i32
    %c0_i32_0 = arith.constant 0 : i32
    return %arg0, %c0_i32, %arg1 : i32, i32, i32
  }
  func.func @transform_3(%arg0: i32, %arg1: i32) -> (i32, i32, i32, i32) {
    %c0_i32 = arith.constant 0 : i32
    %c0_i32_0 = arith.constant 0 : i32
    %c0_i32_1 = arith.constant 0 : i32
    return %arg0, %arg1, %c0_i32, %c0_i32_0 : i32, i32, i32, i32
  }
}

</mosaic_0001>

<llo_original>
// kernel: tpu_custom_call.1
$region0: #{tpu_custom_call.1}
  #allocation0 [shape = 'u32[]', space=smem, size = 0x4, offset = 0x4, fixed_abs, tag = 'smem constant byte address 0x4 - core index']
  #allocation1 [shape = 'u32[144,128]{1,0:T(1,128)}', space=vmem, size = 0x12000, scoped, tag = 'internal scratch']
  %s0 = inlined_call_operand.hbm [shape: f32[2,128,256], index: 0, kind: input, shape index: {}]
  %s1 = inlined_call_operand.hbm [shape: f32[256,128], index: 1, kind: input, shape index: {}]
  %s2 = inlined_call_operand.hbm [shape: f32[2,256,256], index: 2, kind: input, shape index: {}]
  %s3 = inlined_call_operand.hbm [shape: f32[1,1,8,128], index: 3, kind: output, shape index: {}]
  %s4 = sld [smem:[#allocation0]]
  $region34: #{tpu_custom_call.1} parent=0
    _
  %s6 = ssub.s32 1, %s4
  %s7 = scalar_select 0, %s6, %s4
  $region1: #{tpu_custom_call.1} parent=0
    #allocation2 [shape = 'u8[262144]{0}', space=vmem, size = 0x40000, scoped, tag = 'input window, operand 0, single buffered']
    #allocation3 [shape = 's32[1]{0}', space=sflag, size = 0x4, scoped, tag = 'scoped memory for tpu_custom_call.1']
    #allocation4 [shape = 's32[1]{0}', space=sflag, size = 0x4, scoped, tag = 'scoped memory for tpu_custom_call.1']
    #allocation5 [shape = 'u8[131072]{0}', space=vmem, size = 0x20000, scoped, tag = 'input window, operand 1, single buffered']
    #allocation6 [shape = 's32[1]{0}', space=sflag, size = 0x4, scoped, tag = 'scoped memory for tpu_custom_call.1']
    #allocation7 [shape = 'u8[524288]{0}', space=vmem, size = 0x80000, scoped, tag = 'input window, operand 2, single buffered']
    #allocation8 [shape = 'u8[4096]{0}', space=vmem, size = 0x1000, scoped, tag = 'output window, operand 0, single buffered']
    %8 = vsyncpa [#allocation3], 0
    %9 = vsyncpa [#allocation6], 0
    %10 = vsyncpa [#allocation4], 0
    // Predicated region
    $region2: #{tpu_custom_call.1} parent=1 // pred_check
      _
    $region3: #{tpu_custom_call.1} parent=1 // pred_check_branch
      %12 = sbr.rel (0) target = $region5
    $region4: #{tpu_custom_call.1} parent=1 // pred_region
      %s14 = ssub.s32 8192, 8192
      %15 = vsyncadd [#allocation3], %s14
      %s16 = sshll.u32 [#allocation2], 4
      %s17 = int_to_ptr.vmem [resolvable:$true] %s16
      %22 = dma.hbm_to_vmem [thread:$0]  %s0, 8192, %s17, [#allocation3], 256, 256, 16
    $region5: #{tpu_custom_call.1} parent=1 // pred_fallthru
      _
    // Predicated region
    $region6: #{tpu_custom_call.1} parent=1 // pred_check
      _
    $region7: #{tpu_custom_call.1} parent=1 // pred_check_branch
      %24 = sbr.rel (0) target = $region9
    $region8: #{tpu_custom_call.1} parent=1 // pred_region
      %s26 = ssub.s32 4096, 4096
      %27 = vsyncadd [#allocation6], %s26
      %s28 = sshll.u32 [#allocation5], 4
      %s29 = int_to_ptr.vmem [resolvable:$true] %s28
      %34 = dma.hbm_to_vmem [thread:$0]  %s1, 4096, %s29, [#allocation6], 128, 128, 8
    $region9: #{tpu_custom_call.1} parent=1 // pred_fallthru
      _
    // Predicated region
    $region10: #{tpu_custom_call.1} parent=1 // pred_check
      _
    $region11: #{tpu_custom_call.1} parent=1 // pred_check_branch
      %36 = sbr.rel (0) target = $region13
    $region12: #{tpu_custom_call.1} parent=1 // pred_region
      %s38 = ssub.s32 16384, 16384
      %39 = vsyncadd [#allocation6], %s38
      %s40 = sshll.u32 [#allocation7], 4
      %s41 = int_to_ptr.vmem [resolvable:$true] %s40
      %46 = dma.hbm_to_vmem [thread:$0]  %s2, 16384, %s41, [#allocation6], 256, 256, 16
    $region13: #{tpu_custom_call.1} parent=1 // pred_fallthru
      _
    // Predicated region
    $region14: #{tpu_custom_call.1} parent=1 // pred_check
      _
    $region15: #{tpu_custom_call.1} parent=1 // pred_check_branch
      %48 = sbr.rel (0) target = $region17
    $region16: #{tpu_custom_call.1} parent=1 // pred_region
      %49 = dma.done [#allocation3], 8192
    $region17: #{tpu_custom_call.1} parent=1 // pred_fallthru
      _
    // Predicated region
    $region18: #{tpu_custom_call.1} parent=1 // pred_check
      _
    $region19: #{tpu_custom_call.1} parent=1 // pred_check_branch
      %51 = sbr.rel (0) target = $region21
    $region20: #{tpu_custom_call.1} parent=1 // pred_region
      %52 = dma.done [#allocation6], 4096
    $region21: #{tpu_custom_call.1} parent=1 // pred_fallthru
      _
    // Predicated region
    $region22: #{tpu_custom_call.1} parent=1 // pred_check
      _
    $region23: #{tpu_custom_call.1} parent=1 // pred_check_branch
      %54 = sbr.rel (0) target = $region25
    $region24: #{tpu_custom_call.1} parent=1 // pred_region
      %55 = dma.done [#allocation6], 16384
    $region25: #{tpu_custom_call.1} parent=1 // pred_fallthru
      _
    %v56 = vld [vmem:[#allocation5] sm:$0xff]
    %v57 = vld [vmem:[#allocation5 + $0x8] sm:$0xff]
    %v58 = vld [vmem:[#allocation5 + $0x10] sm:$0xff]
    %v59 = vld [vmem:[#allocation5 + $0x18] sm:$0xff]
    %v60 = vld [vmem:[#allocation5 + $0x20] sm:$0xff]
    %v61 = vld [vmem:[#allocation5 + $0x28] sm:$0xff]
    %v62 = vld [vmem:[#allocation5 + $0x30] sm:$0xff]
    %v63 = vld [vmem:[#allocation5 + $0x38] sm:$0xff]
    %v64 = vld [vmem:[#allocation5 + $0x40] sm:$0xff]
    %v65 = vld [vmem:[#allocation5 + $0x48] sm:$0xff]
    %v66 = vld [vmem:[#allocation5 + $0x50] sm:$0xff]
    %v67 = vld [vmem:[#allocation5 + $0x58] sm:$0xff]
    %v68 = vld [vmem:[#allocation5 + $0x60] sm:$0xff]
    %v69 = vld [vmem:[#allocation5 + $0x68] sm:$0xff]
    %v70 = vld [vmem:[#allocation5 + $0x70] sm:$0xff]
    %v71 = vld [vmem:[#allocation5 + $0x78] sm:$0xff]
    %v72 = vld [vmem:[#allocation5 + $0x80] sm:$0xff]
    %v73 = vld [vmem:[#allocation5 + $0x88] sm:$0xff]
    %v74 = vld [vmem:[#allocation5 + $0x90] sm:$0xff]
    %v75 = vld [vmem:[#allocation5 + $0x98] sm:$0xff]
    %v76 = vld [vmem:[#allocation5 + $0xa0] sm:$0xff]
    %v77 = vld [vmem:[#allocation5 + $0xa8] sm:$0xff]
    %v78 = vld [vmem:[#allocation5 + $0xb0] sm:$0xff]
    %v79 = vld [vmem:[#allocation5 + $0xb8] sm:$0xff]
    %v80 = vld [vmem:[#allocation5 + $0xc0] sm:$0xff]
    %v81 = vld [vmem:[#allocation5 + $0xc8] sm:$0xff]
    %v82 = vld [vmem:[#allocation5 + $0xd0] sm:$0xff]
    %v83 = vld [vmem:[#allocation5 + $0xd8] sm:$0xff]
    %v84 = vld [vmem:[#allocation5 + $0xe0] sm:$0xff]
    %v85 = vld [vmem:[#allocation5 + $0xe8] sm:$0xff]
    %v86 = vld [vmem:[#allocation5 + $0xf0] sm:$0xff]
    %v87 = vld [vmem:[#allocation5 + $0xf8] sm:$0xff]
    %v88 = vld [vmem:[#allocation2] sm:$0xff]
    %v89 = vld [vmem:[#allocation2 + $0x8] sm:$0xff]
    %v90 = vld [vmem:[#allocation2 + $0x10] sm:$0xff]
    %v91 = vld [vmem:[#allocation2 + $0x18] sm:$0xff]
    %v92 = vld [vmem:[#allocation2 + $0x20] sm:$0xff]
    %v93 = vld [vmem:[#allocation2 + $0x28] sm:$0xff]
    %v94 = vld [vmem:[#allocation2 + $0x30] sm:$0xff]
    %v95 = vld [vmem:[#allocation2 + $0x38] sm:$0xff]
    %v96 = vld [vmem:[#allocation2 + $0x40] sm:$0xff]
    %v97 = vld [vmem:[#allocation2 + $0x48] sm:$0xff]
    %v98 = vld [vmem:[#allocation2 + $0x50] sm:$0xff]
    %v99 = vld [vmem:[#allocation2 + $0x58] sm:$0xff]
    %v100 = vld [vmem:[#allocation2 + $0x60] sm:$0xff]
    %v101 = vld [vmem:[#allocation2 + $0x68] sm:$0xff]
    %v102 = vld [vmem:[#allocation2 + $0x70] sm:$0xff]
    %v103 = vld [vmem:[#allocation2 + $0x78] sm:$0xff]
    %v104 = vld [vmem:[#allocation2 + $0x80] sm:$0xff]
    %v105 = vld [vmem:[#allocation2 + $0x88] sm:$0xff]
    %v106 = vld [vmem:[#allocation2 + $0x90] sm:$0xff]
    %v107 = vld [vmem:[#allocation2 + $0x98] sm:$0xff]
    %v108 = vld [vmem:[#allocation2 + $0xa0] sm:$0xff]
    %v109 = vld [vmem:[#allocation2 + $0xa8] sm:$0xff]
    %v110 = vld [vmem:[#allocation2 + $0xb0] sm:$0xff]
    %v111 = vld [vmem:[#allocation2 + $0xb8] sm:$0xff]
    %v112 = vld [vmem:[#allocation2 + $0xc0] sm:$0xff]
    %v113 = vld [vmem:[#allocation2 + $0xc8] sm:$0xff]
    %v114 = vld [vmem:[#allocation2 + $0xd0] sm:$0xff]
    %v115 = vld [vmem:[#allocation2 + $0xd8] sm:$0xff]
    %v116 = vld [vmem:[#allocation2 + $0xe0] sm:$0xff]
    %v117 = vld [vmem:[#allocation2 + $0xe8] sm:$0xff]
    %v118 = vld [vmem:[#allocation2 + $0xf0] sm:$0xff]
    %v119 = vld [vmem:[#allocation2 + $0xf8] sm:$0xff]
    %120 = vmatprep.subr.mxu0 %v89
    %121 = vmatpush1.msra.mxu0 %v88
    %122 = vmatprep.subr.mxu0 %v91
    %123 = vmatpush1.msra.mxu0 %v90
    %124 = vmatprep.subr.mxu0 %v93
    %125 = vmatpush1.msra.mxu0 %v92
    %126 = vmatprep.subr.mxu0 %v95
    %127 = vmatpush1.msra.mxu0 %v94
    %128 = vmatprep.subr.mxu0 %v97
    %129 = vmatpush1.msra.mxu0 %v96
    %130 = vmatprep.subr.mxu0 %v99
    %131 = vmatpush1.msra.mxu0 %v98
    %132 = vmatprep.subr.mxu0 %v101
    %133 = vmatpush1.msra.mxu0 %v100
    %134 = vmatprep.subr.mxu0 %v103
    %135 = vmatpush1.msra.mxu0 %v102
    %136 = vmatprep.subr.mxu0 %v105
    %137 = vmatpush1.msra.mxu0 %v104
    %138 = vmatprep.subr.mxu0 %v107
    %139 = vmatpush1.msra.mxu0 %v106
    %140 = vmatprep.subr.mxu0 %v109
    %141 = vmatpush1.msra.mxu0 %v108
    %142 = vmatprep.subr.mxu0 %v111
    %143 = vmatpush1.msra.mxu0 %v110
    %144 = vmatprep.subr.mxu0 %v113
    %145 = vmatpush1.msra.mxu0 %v112
    %146 = vmatprep.subr.mxu0 %v115
    %147 = vmatpush1.msra.mxu0 %v114
    %148 = vmatprep.subr.mxu0 %v117
    %149 = vmatpush1.msra.mxu0 %v116
    %150 = vmatprep.subr.mxu0 %v119
    %151 = vmatpush1.msra.mxu0 %v118
    %152 = vmatprep.subr.mxu0 0.0
    %153 = vmatpush1.msra.mxu0 0.0
    %154 = vmatprep.subr.mxu0 0.0
    %155 = vmatpush1.msra.mxu0 0.0
    %156 = vmatprep.subr.mxu0 0.0
    %157 = vmatpush1.msra.mxu0 0.0
    %158 = vmatprep.subr.mxu0 0.0
    %159 = vmatpush1.msra.mxu0 0.0
    %160 = vmatprep.subr.mxu0 0.0
    %161 = vmatpush1.msra.mxu0 0.0
    %162 = vmatprep.subr.mxu0 0.0
    %163 = vmatpush1.msra.mxu0 0.0
    %164 = vmatprep.subr.mxu0 0.0
    %165 = vmatpush1.msra.mxu0 0.0
    %166 = vmatprep.subr.mxu0 0.0
    %167 = vmatpush1.msra.mxu0 0.0
    %168 = vmatprep.subr.mxu0 0.0
    %169 = vmatpush1.msra.mxu0 0.0
    %170 = vmatprep.subr.mxu0 0.0
    %171 = vmatpush1.msra.mxu0 0.0
    %172 = vmatprep.subr.mxu0 0.0
    %173 = vmatpush1.msra.mxu0 0.0
    %174 = vmatprep.subr.mxu0 0.0
    %175 = vmatpush1.msra.mxu0 0.0
    %176 = vmatprep.subr.mxu0 0.0
    %177 = vmatpush1.msra.mxu0 0.0
    %178 = vmatprep.subr.mxu0 0.0
    %179 = vmatpush1.msra.mxu0 0.0
    %180 = vmatprep.subr.mxu0 0.0
    %181 = vmatpush1.msra.mxu0 0.0
    %182 = vmatprep.subr.mxu0 0.0
    %183 = vmatpush1.msra.mxu0 0.0
    %184 = vmatprep.mubr.f32.mxu0 0.0
    %185 = vmatmul.mubr.f32.gmra.mrb[0].mxu0 %v56
    %v186 = vpop.f32.mrb[0].mxu0
    %v187 = vadd.f32 0.0, %v186
    %v188 = vpop.f32.mrb[0].mxu0
    %v189 = vadd.f32 0.0, %v188
    %190 = vmatprep.mubr.f32.mxu0 0.0
    %191 = vmatmul.mubr.f32.gmra.mrb[0].mxu0 %v57
    %v192 = vpop.f32.mrb[0].mxu0
    %v193 = vadd.f32 0.0, %v192
    %v194 = vpop.f32.mrb[0].mxu0
    %v195 = vadd.f32 0.0, %v194
    %196 = vmatprep.mubr.f32.mxu0 0.0
    %197 = vmatmul.mubr.f32.gmra.mrb[0].mxu0 %v58
    %v198 = vpop.f32.mrb[0].mxu0
    %v199 = vadd.f32 0.0, %v198
    %v200 = vpop.f32.mrb[0].mxu0
    %v201 = vadd.f32 0.0, %v200
    %202 = vmatprep.mubr.f32.mxu0 0.0
    %203 = vmatmul.mubr.f32.gmra.mrb[0].mxu0 %v59
    %v204 = vpop.f32.mrb[0].mxu0
    %v205 = vadd.f32 0.0, %v204
    %v206 = vpop.f32.mrb[0].mxu0
    %v207 = vadd.f32 0.0, %v206
    %208 = vmatprep.mubr.f32.mxu0 0.0
    %209 = vmatmul.mubr.f32.gmra.mrb[0].mxu0 %v60
    %v210 = vpop.f32.mrb[0].mxu0
    %v211 = vadd.f32 0.0, %v210
    %v212 = vpop.f32.mrb[0].mxu0
    %v213 = vadd.f32 0.0, %v212
    %214 = vmatprep.mubr.f32.mxu0 0.0
    %215 = vmatmul.mubr.f32.gmra.mrb[0].mxu0 %v61
    %v216 = vpop.f32.mrb[0].mxu0
    %v217 = vadd.f32 0.0, %v216
    %v218 = vpop.f32.mrb[0].mxu0
    %v219 = vadd.f32 0.0, %v218
    %220 = vmatprep.mubr.f32.mxu0 0.0
    %221 = vmatmul.mubr.f32.gmra.mrb[0].mxu0 %v62
    %v222 = vpop.f32.mrb[0].mxu0
    %v223 = vadd.f32 0.0, %v222
    %v224 = vpop.f32.mrb[0].mxu0
    %v225 = vadd.f32 0.0, %v224
    %226 = vmatprep.mubr.f32.mxu0 0.0
    %227 = vmatmul.mubr.f32.gmra.mrb[0].mxu0 %v63
    %v228 = vpop.f32.mrb[0].mxu0
    %v229 = vadd.f32 0.0, %v228
    %v230 = vpop.f32.mrb[0].mxu0
    %v231 = vadd.f32 0.0, %v230
    %232 = vmatprep.mubr.f32.mxu0 0.0
    %233 = vmatmul.mubr.f32.gmra.mrb[0].mxu0 %v64
    %v234 = vpop.f32.mrb[0].mxu0
    %v235 = vadd.f32 0.0, %v234
    %v236 = vpop.f32.mrb[0].mxu0
    %v237 = vadd.f32 0.0, %v236
    %238 = vmatprep.mubr.f32.mxu0 0.0
    %239 = vmatmul.mubr.f32.gmra.mrb[0].mxu0 %v65
    %v240 = vpop.f32.mrb[0].mxu0
    %v241 = vadd.f32 0.0, %v240
    %v242 = vpop.f32.mrb[0].mxu0
    %v243 = vadd.f32 0.0, %v242
    %244 = vmatprep.mubr.f32.mxu0 0.0
    %245 = vmatmul.mubr.f32.gmra.mrb[0].mxu0 %v66
    %v246 = vpop.f32.mrb[0].mxu0
    %v247 = vadd.f32 0.0, %v246
    %v248 = vpop.f32.mrb[0].mxu0
    %v249 = vadd.f32 0.0, %v248
    %250 = vmatprep.mubr.f32.mxu0 0.0
    %251 = vmatmul.mubr.f32.gmra.mrb[0].mxu0 %v67
    %v252 = vpop.f32.mrb[0].mxu0
    %v253 = vadd.f32 0.0, %v252
    %v254 = vpop.f32.mrb[0].mxu0
    %v255 = vadd.f32 0.0, %v254
    %256 = vmatprep.mubr.f32.mxu0 0.0
    %257 = vmatmul.mubr.f32.gmra.mrb[0].mxu0 %v68
    %v258 = vpop.f32.mrb[0].mxu0
    %v259 = vadd.f32 0.0, %v258
    %v260 = vpop.f32.mrb[0].mxu0
    %v261 = vadd.f32 0.0, %v260
    %262 = vmatprep.mubr.f32.mxu0 0.0
    %263 = vmatmul.mubr.f32.gmra.mrb[0].mxu0 %v69
    %v264 = vpop.f32.mrb[0].mxu0
    %v265 = vadd.f32 0.0, %v264
    %v266 = vpop.f32.mrb[0].mxu0
    %v267 = vadd.f32 0.0, %v266
    %268 = vmatprep.mubr.f32.mxu0 0.0
    %269 = vmatmul.mubr.f32.gmra.mrb[0].mxu0 %v70
    %v270 = vpop.f32.mrb[0].mxu0
    %v271 = vadd.f32 0.0, %v270
    %v272 = vpop.f32.mrb[0].mxu0
    %v273 = vadd.f32 0.0, %v272
    %274 = vmatprep.mubr.f32.mxu0 0.0
    %275 = vmatmul.mubr.f32.gmra.mrb[0].mxu0 %v71
    %v276 = vpop.f32.mrb[0].mxu0
    %v277 = vadd.f32 0.0, %v276
    %v278 = vpop.f32.mrb[0].mxu0
    %v279 = vadd.f32 0.0, %v278
    %280 = vmatprep.mubr.f32.mxu0 0.0
    %281 = vmatmul.mubr.f32.gmra.mrb[0].mxu0 %v72
    %v282 = vpop.f32.mrb[0].mxu0
    %v283 = vadd.f32 0.0, %v282
    %v284 = vpop.f32.mrb[0].mxu0
    %v285 = vadd.f32 0.0, %v284
    %286 = vmatprep.mubr.f32.mxu0 0.0
    %287 = vmatmul.mubr.f32.gmra.mrb[0].mxu0 %v73
    %v288 = vpop.f32.mrb[0].mxu0
    %v289 = vadd.f32 0.0, %v288
    %v290 = vpop.f32.mrb[0].mxu0
    %v291 = vadd.f32 0.0, %v290
    %292 = vmatprep.mubr.f32.mxu0 0.0
    %293 = vmatmul.mubr.f32.gmra.mrb[0].mxu0 %v74
    %v294 = vpop.f32.mrb[0].mxu0
    %v295 = vadd.f32 0.0, %v294
    %v296 = vpop.f32.mrb[0].mxu0
    %v297 = vadd.f32 0.0, %v296
    %298 = vmatprep.mubr.f32.mxu0 0.0
    %299 = vmatmul.mubr.f32.gmra.mrb[0].mxu0 %v75
    %v300 = vpop.f32.mrb[0].mxu0
    %v301 = vadd.f32 0.0, %v300
    %v302 = vpop.f32.mrb[0].mxu0
    %v303 = vadd.f32 0.0, %v302
    %304 = vmatprep.mubr.f32.mxu0 0.0
    %305 = vmatmul.mubr.f32.gmra.mrb[0].mxu0 %v76
    %v306 = vpop.f32.mrb[0].mxu0
    %v307 = vadd.f32 0.0, %v306
    %v308 = vpop.f32.mrb[0].mxu0
    %v309 = vadd.f32 0.0, %v308
    %310 = vmatprep.mubr.f32.mxu0 0.0
    %311 = vmatmul.mubr.f32.gmra.mrb[0].mxu0 %v77
    %v312 = vpop.f32.mrb[0].mxu0
    %v313 = vadd.f32 0.0, %v312
    %v314 = vpop.f32.mrb[0].mxu0
    %v315 = vadd.f32 0.0, %v314
    %316 = vmatprep.mubr.f32.mxu0 0.0
    %317 = vmatmul.mubr.f32.gmra.mrb[0].mxu0 %v78
    %v318 = vpop.f32.mrb[0].mxu0
    %v319 = vadd.f32 0.0, %v318
    %v320 = vpop.f32.mrb[0].mxu0
    %v321 = vadd.f32 0.0, %v320
    %322 = vmatprep.mubr.f32.mxu0 0.0
    %323 = vmatmul.mubr.f32.gmra.mrb[0].mxu0 %v79
    %v324 = vpop.f32.mrb[0].mxu0
    %v325 = vadd.f32 0.0, %v324
    %v326 = vpop.f32.mrb[0].mxu0
    %v327 = vadd.f32 0.0, %v326
    %328 = vmatprep.mubr.f32.mxu0 0.0
    %329 = vmatmul.mubr.f32.gmra.mrb[0].mxu0 %v80
    %v330 = vpop.f32.mrb[0].mxu0
    %v331 = vadd.f32 0.0, %v330
    %v332 = vpop.f32.mrb[0].mxu0
    %v333 = vadd.f32 0.0, %v332
    %334 = vmatprep.mubr.f32.mxu0 0.0
    %335 = vmatmul.mubr.f32.gmra.mrb[0].mxu0 %v81
    %v336 = vpop.f32.mrb[0].mxu0
    %v337 = vadd.f32 0.0, %v336
    %v338 = vpop.f32.mrb[0].mxu0
    %v339 = vadd.f32 0.0, %v338
    %340 = vmatprep.mubr.f32.mxu0 0.0
    %341 = vmatmul.mubr.f32.gmra.mrb[0].mxu0 %v82
    %v342 = vpop.f32.mrb[0].mxu0
    %v343 = vadd.f32 0.0, %v342
    %v344 = vpop.f32.mrb[0].mxu0
    %v345 = vadd.f32 0.0, %v344
    %346 = vmatprep.mubr.f32.mxu0 0.0
    %347 = vmatmul.mubr.f32.gmra.mrb[0].mxu0 %v83
    %v348 = vpop.f32.mrb[0].mxu0
    %v349 = vadd.f32 0.0, %v348
    %v350 = vpop.f32.mrb[0].mxu0
    %v351 = vadd.f32 0.0, %v350
    %352 = vmatprep.mubr.f32.mxu0 0.0
    %353 = vmatmul.mubr.f32.gmra.mrb[0].mxu0 %v84
    %v354 = vpop.f32.mrb[0].mxu0
    %v355 = vadd.f32 0.0, %v354
    %v356 = vpop.f32.mrb[0].mxu0
    %v357 = vadd.f32 0.0, %v356
    %358 = vmatprep.mubr.f32.mxu0 0.0
    %359 = vmatmul.mubr.f32.gmra.mrb[0].mxu0 %v85
    %v360 = vpop.f32.mrb[0].mxu0
    %v361 = vadd.f32 0.0, %v360
    %v362 = vpop.f32.mrb[0].mxu0
    %v363 = vadd.f32 0.0, %v362
    %364 = vmatprep.mubr.f32.mxu0 0.0
    %365 = vmatmul.mubr.f32.gmra.mrb[0].mxu0 %v86
    %v366 = vpop.f32.mrb[0].mxu0
    %v367 = vadd.f32 0.0, %v366
    %v368 = vpop.f32.mrb[0].mxu0
    %v369 = vadd.f32 0.0, %v368
    %370 = vmatprep.mubr.f32.mxu0 0.0
    %371 = vmatmul.mubr.f32.gmra.mrb[0].mxu0 %v87
    %v372 = vpop.f32.mrb[0].mxu0
    %v373 = vadd.f32 0.0, %v372
    %v374 = vpop.f32.mrb[0].mxu0
    %v375 = vadd.f32 0.0, %v374
    %376 = vdwg.mxu0
    %v377 = vld [vmem:[#allocation7] sm:$0xff]
    %v378 = vld [vmem:[#allocation7 + $0x8] sm:$0xff]
    %v379 = vld [vmem:[#allocation7 + $0x10] sm:$0xff]
    %v380 = vld [vmem:[#allocation7 + $0x18] sm:$0xff]
    %v381 = vld [vmem:[#allocation7 + $0x20] sm:$0xff]
    %v382 = vld [vmem:[#allocation7 + $0x28] sm:$0xff]
    %v383 = vld [vmem:[#allocation7 + $0x30] sm:$0xff]
    %v384 = vld [vmem:[#allocation7 + $0x38] sm:$0xff]
    %v385 = vld [vmem:[#allocation7 + $0x40] sm:$0xff]
    %v386 = vld [vmem:[#allocation7 + $0x48] sm:$0xff]
    %v387 = vld [vmem:[#allocation7 + $0x50] sm:$0xff]
    %v388 = vld [vmem:[#allocation7 + $0x58] sm:$0xff]
    %v389 = vld [vmem:[#allocation7 + $0x60] sm:$0xff]
    %v390 = vld [vmem:[#allocation7 + $0x68] sm:$0xff]
    %v391 = vld [vmem:[#allocation7 + $0x70] sm:$0xff]
    %v392 = vld [vmem:[#allocation7 + $0x78] sm:$0xff]
    %v393 = vld [vmem:[#allocation7 + $0x80] sm:$0xff]
    %v394 = vld [vmem:[#allocation7 + $0x88] sm:$0xff]
    %v395 = vld [vmem:[#allocation7 + $0x90] sm:$0xff]
    %v396 = vld [vmem:[#allocation7 + $0x98] sm:$0xff]
    %v397 = vld [vmem:[#allocation7 + $0xa0] sm:$0xff]
    %v398 = vld [vmem:[#allocation7 + $0xa8] sm:$0xff]
    %v399 = vld [vmem:[#allocation7 + $0xb0] sm:$0xff]
    %v400 = vld [vmem:[#allocation7 + $0xb8] sm:$0xff]
    %v401 = vld [vmem:[#allocation7 + $0xc0] sm:$0xff]
    %v402 = vld [vmem:[#allocation7 + $0xc8] sm:$0xff]
    %v403 = vld [vmem:[#allocation7 + $0xd0] sm:$0xff]
    %v404 = vld [vmem:[#allocation7 + $0xd8] sm:$0xff]
    %v405 = vld [vmem:[#allocation7 + $0xe0] sm:$0xff]
    %v406 = vld [vmem:[#allocation7 + $0xe8] sm:$0xff]
    %v407 = vld [vmem:[#allocation7 + $0xf0] sm:$0xff]
    %v408 = vld [vmem:[#allocation7 + $0xf8] sm:$0xff]
    %v409 = vld [vmem:[#allocation7 + $0x100] sm:$0xff]
    %v410 = vld [vmem:[#allocation7 + $0x108] sm:$0xff]
    %v411 = vld [vmem:[#allocation7 + $0x110] sm:$0xff]
    %v412 = vld [vmem:[#allocation7 + $0x118] sm:$0xff]
    %v413 = vld [vmem:[#allocation7 + $0x120] sm:$0xff]
    %v414 = vld [vmem:[#allocation7 + $0x128] sm:$0xff]
    %v415 = vld [vmem:[#allocation7 + $0x130] sm:$0xff]
    %v416 = vld [vmem:[#allocation7 + $0x138] sm:$0xff]
    %v417 = vld [vmem:[#allocation7 + $0x140] sm:$0xff]
    %v418 = vld [vmem:[#allocation7 + $0x148] sm:$0xff]
    %v419 = vld [vmem:[#allocation7 + $0x150] sm:$0xff]
    %v420 = vld [vmem:[#allocation7 + $0x158] sm:$0xff]
    %v421 = vld [vmem:[#allocation7 + $0x160] sm:$0xff]
    %v422 = vld [vmem:[#allocation7 + $0x168] sm:$0xff]
    %v423 = vld [vmem:[#allocation7 + $0x170] sm:$0xff]
    %v424 = vld [vmem:[#allocation7 + $0x178] sm:$0xff]
    %v425 = vld [vmem:[#allocation7 + $0x180] sm:$0xff]
    %v426 = vld [vmem:[#allocation7 + $0x188] sm:$0xff]
    %v427 = vld [vmem:[#allocation7 + $0x190] sm:$0xff]
    %v428 = vld [vmem:[#allocation7 + $0x198] sm:$0xff]
    %v429 = vld [vmem:[#allocation7 + $0x1a0] sm:$0xff]
    %v430 = vld [vmem:[#allocation7 + $0x1a8] sm:$0xff]
    %v431 = vld [vmem:[#allocation7 + $0x1b0] sm:$0xff]
    %v432 = vld [vmem:[#allocation7 + $0x1b8] sm:$0xff]
    %v433 = vld [vmem:[#allocation7 + $0x1c0] sm:$0xff]
    %v434 = vld [vmem:[#allocation7 + $0x1c8] sm:$0xff]
    %v435 = vld [vmem:[#allocation7 + $0x1d0] sm:$0xff]
    %v436 = vld [vmem:[#allocation7 + $0x1d8] sm:$0xff]
    %v437 = vld [vmem:[#allocation7 + $0x1e0] sm:$0xff]
    %v438 = vld [vmem:[#allocation7 + $0x1e8] sm:$0xff]
    %v439 = vld [vmem:[#allocation7 + $0x1f0] sm:$0xff]
    %v440 = vld [vmem:[#allocation7 + $0x1f8] sm:$0xff]
    %v441 = vsub.f32 %v187, %v377
    %v442 = vsub.f32 %v189, %v378
    %v443 = vsub.f32 %v193, %v379
    %v444 = vsub.f32 %v195, %v380
    %v445 = vsub.f32 %v199, %v381
    %v446 = vsub.f32 %v201, %v382
    %v447 = vsub.f32 %v205, %v383
    %v448 = vsub.f32 %v207, %v384
    %v449 = vsub.f32 %v211, %v385
    %v450 = vsub.f32 %v213, %v386
    %v451 = vsub.f32 %v217, %v387
    %v452 = vsub.f32 %v219, %v388
    %v453 = vsub.f32 %v223, %v389
    %v454 = vsub.f32 %v225, %v390
    %v455 = vsub.f32 %v229, %v391
    %v456 = vsub.f32 %v231, %v392
    %v457 = vsub.f32 %v235, %v393
    %v458 = vsub.f32 %v237, %v394
    %v459 = vsub.f32 %v241, %v395
    %v460 = vsub.f32 %v243, %v396
    %v461 = vsub.f32 %v247, %v397
    %v462 = vsub.f32 %v249, %v398
    %v463 = vsub.f32 %v253, %v399
    %v464 = vsub.f32 %v255, %v400
    %v465 = vsub.f32 %v259, %v401
    %v466 = vsub.f32 %v261, %v402
    %v467 = vsub.f32 %v265, %v403
    %v468 = vsub.f32 %v267, %v404
    %v469 = vsub.f32 %v271, %v405
    %v470 = vsub.f32 %v273, %v406
    %v471 = vsub.f32 %v277, %v407
    %v472 = vsub.f32 %v279, %v408
    %v473 = vsub.f32 %v283, %v409
    %v474 = vsub.f32 %v285, %v410
    %v475 = vsub.f32 %v289, %v411
    %v476 = vsub.f32 %v291, %v412
    %v477 = vsub.f32 %v295, %v413
    %v478 = vsub.f32 %v297, %v414
    %v479 = vsub.f32 %v301, %v415
    %v480 = vsub.f32 %v303, %v416
    %v481 = vsub.f32 %v307, %v417
    %v482 = vsub.f32 %v309, %v418
    %v483 = vsub.f32 %v313, %v419
    %v484 = vsub.f32 %v315, %v420
    %v485 = vsub.f32 %v319, %v421
    %v486 = vsub.f32 %v321, %v422
    %v487 = vsub.f32 %v325, %v423
    %v488 = vsub.f32 %v327, %v424
    %v489 = vsub.f32 %v331, %v425
    %v490 = vsub.f32 %v333, %v426
    %v491 = vsub.f32 %v337, %v427
    %v492 = vsub.f32 %v339, %v428
    %v493 = vsub.f32 %v343, %v429
    %v494 = vsub.f32 %v345, %v430
    %v495 = vsub.f32 %v349, %v431
    %v496 = vsub.f32 %v351, %v432
    %v497 = vsub.f32 %v355, %v433
    %v498 = vsub.f32 %v357, %v434
    %v499 = vsub.f32 %v361, %v435
    %v500 = vsub.f32 %v363, %v436
    %v501 = vsub.f32 %v367, %v437
    %v502 = vsub.f32 %v369, %v438
    %v503 = vsub.f32 %v373, %v439
    %v504 = vsub.f32 %v375, %v440
    %v505 = vmul.f32 %v441, %v441
    %v506 = vmul.f32 %v442, %v442
    %v507 = vmul.f32 %v443, %v443
    %v508 = vmul.f32 %v444, %v444
    %v509 = vmul.f32 %v445, %v445
    %v510 = vmul.f32 %v446, %v446
    %v511 = vmul.f32 %v447, %v447
    %v512 = vmul.f32 %v448, %v448
    %v513 = vmul.f32 %v449, %v449
    %v514 = vmul.f32 %v450, %v450
    %v515 = vmul.f32 %v451, %v451
    %v516 = vmul.f32 %v452, %v452
    %v517 = vmul.f32 %v453, %v453
    %v518 = vmul.f32 %v454, %v454
    %v519 = vmul.f32 %v455, %v455
    %v520 = vmul.f32 %v456, %v456
    %v521 = vmul.f32 %v457, %v457
    %v522 = vmul.f32 %v458, %v458
    %v523 = vmul.f32 %v459, %v459
    %v524 = vmul.f32 %v460, %v460
    %v525 = vmul.f32 %v461, %v461
    %v526 = vmul.f32 %v462, %v462
    %v527 = vmul.f32 %v463, %v463
    %v528 = vmul.f32 %v464, %v464
    %v529 = vmul.f32 %v465, %v465
    %v530 = vmul.f32 %v466, %v466
    %v531 = vmul.f32 %v467, %v467
    %v532 = vmul.f32 %v468, %v468
    %v533 = vmul.f32 %v469, %v469
    %v534 = vmul.f32 %v470, %v470
    %v535 = vmul.f32 %v471, %v471
    %v536 = vmul.f32 %v472, %v472
    %v537 = vmul.f32 %v473, %v473
    %v538 = vmul.f32 %v474, %v474
    %v539 = vmul.f32 %v475, %v475
    %v540 = vmul.f32 %v476, %v476
    %v541 = vmul.f32 %v477, %v477
    %v542 = vmul.f32 %v478, %v478
    %v543 = vmul.f32 %v479, %v479
    %v544 = vmul.f32 %v480, %v480
    %v545 = vmul.f32 %v481, %v481
    %v546 = vmul.f32 %v482, %v482
    %v547 = vmul.f32 %v483, %v483
    %v548 = vmul.f32 %v484, %v484
    %v549 = vmul.f32 %v485, %v485
    %v550 = vmul.f32 %v486, %v486
    %v551 = vmul.f32 %v487, %v487
    %v552 = vmul.f32 %v488, %v488
    %v553 = vmul.f32 %v489, %v489
    %v554 = vmul.f32 %v490, %v490
    %v555 = vmul.f32 %v491, %v491
    %v556 = vmul.f32 %v492, %v492
    %v557 = vmul.f32 %v493, %v493
    %v558 = vmul.f32 %v494, %v494
    %v559 = vmul.f32 %v495, %v495
    %v560 = vmul.f32 %v496, %v496
    %v561 = vmul.f32 %v497, %v497
    %v562 = vmul.f32 %v498, %v498
    %v563 = vmul.f32 %v499, %v499
    %v564 = vmul.f32 %v500, %v500
    %v565 = vmul.f32 %v501, %v501
    %v566 = vmul.f32 %v502, %v502
    %v567 = vmul.f32 %v503, %v503
    %v568 = vmul.f32 %v504, %v504
    %v569 = vadd.f32 %v505, %v506
    %v570 = vadd.f32 %v569, %v507
    %v571 = vadd.f32 %v570, %v508
    %v572 = vadd.f32 %v571, %v509
    %v573 = vadd.f32 %v572, %v510
    %v574 = vadd.f32 %v573, %v511
    %v575 = vadd.f32 %v574, %v512
    %v576 = vadd.f32 %v575, %v513
    %v577 = vadd.f32 %v576, %v514
    %v578 = vadd.f32 %v577, %v515
    %v579 = vadd.f32 %v578, %v516
    %v580 = vadd.f32 %v579, %v517
    %v581 = vadd.f32 %v580, %v518
    %v582 = vadd.f32 %v581, %v519
    %v583 = vadd.f32 %v582, %v520
    %v584 = vadd.f32 %v583, %v521
    %v585 = vadd.f32 %v584, %v522
    %v586 = vadd.f32 %v585, %v523
    %v587 = vadd.f32 %v586, %v524
    %v588 = vadd.f32 %v587, %v525
    %v589 = vadd.f32 %v588, %v526
    %v590 = vadd.f32 %v589, %v527
    %v591 = vadd.f32 %v590, %v528
    %v592 = vadd.f32 %v591, %v529
    %v593 = vadd.f32 %v592, %v530
    %v594 = vadd.f32 %v593, %v531
    %v595 = vadd.f32 %v594, %v532
    %v596 = vadd.f32 %v595, %v533
    %v597 = vadd.f32 %v596, %v534
    %v598 = vadd.f32 %v597, %v535
    %v599 = vadd.f32 %v598, %v536
    %v600 = vadd.f32 %v599, %v537
    %v601 = vadd.f32 %v600, %v538
    %v602 = vadd.f32 %v601, %v539
    %v603 = vadd.f32 %v602, %v540
    %v604 = vadd.f32 %v603, %v541
    %v605 = vadd.f32 %v604, %v542
    %v606 = vadd.f32 %v605, %v543
    %v607 = vadd.f32 %v606, %v544
    %v608 = vadd.f32 %v607, %v545
    %v609 = vadd.f32 %v608, %v546
    %v610 = vadd.f32 %v609, %v547
    %v611 = vadd.f32 %v610, %v548
    %v612 = vadd.f32 %v611, %v549
    %v613 = vadd.f32 %v612, %v550
    %v614 = vadd.f32 %v613, %v551
    %v615 = vadd.f32 %v614, %v552
    %v616 = vadd.f32 %v615, %v553
    %v617 = vadd.f32 %v616, %v554
    %v618 = vadd.f32 %v617, %v555
    %v619 = vadd.f32 %v618, %v556
    %v620 = vadd.f32 %v619, %v557
    %v621 = vadd.f32 %v620, %v558
    %v622 = vadd.f32 %v621, %v559
    %v623 = vadd.f32 %v622, %v560
    %v624 = vadd.f32 %v623, %v561
    %v625 = vadd.f32 %v624, %v562
    %v626 = vadd.f32 %v625, %v563
    %v627 = vadd.f32 %v626, %v564
    %v628 = vadd.f32 %v627, %v565
    %v629 = vadd.f32 %v628, %v566
    %v630 = vadd.f32 %v629, %v567
    %v631 = vadd.f32 %v630, %v568
    %632 = vadd.xlane.f32.xlu0 %v631
    %v633 = vpop.xlane.xlu0 %632
    %v634 = vrot.slane %v633, 4
    %v635 = vadd.f32 %v633, %v634
    %v636 = vrot.slane %v635, 2
    %v637 = vadd.f32 %v635, %v636
    %v638 = vrot.slane %v637, 1
    %v639 = vadd.f32 %v637, %v638
    %s640 = vtos %v639
    %s641 = sadd.f32 %s640, 0.0
    %s642 = scalar_lea.vmem [#allocation2], 256
    %v643 = vld [vmem:[%s642] sm:$0xff]
    %v644 = vld [vmem:[%s642 + $0x8] sm:$0xff]
    %v645 = vld [vmem:[%s642 + $0x10] sm:$0xff]
    %v646 = vld [vmem:[%s642 + $0x18] sm:$0xff]
    %v647 = vld [vmem:[%s642 + $0x20] sm:$0xff]
    %v648 = vld [vmem:[%s642 + $0x28] sm:$0xff]
    %v649 = vld [vmem:[%s642 + $0x30] sm:$0xff]
    %v650 = vld [vmem:[%s642 + $0x38] sm:$0xff]
    %v651 = vld [vmem:[%s642 + $0x40] sm:$0xff]
    %v652 = vld [vmem:[%s642 + $0x48] sm:$0xff]
    %v653 = vld [vmem:[%s642 + $0x50] sm:$0xff]
    %v654 = vld [vmem:[%s642 + $0x58] sm:$0xff]
    %v655 = vld [vmem:[%s642 + $0x60] sm:$0xff]
    %v656 = vld [vmem:[%s642 + $0x68] sm:$0xff]
    %v657 = vld [vmem:[%s642 + $0x70] sm:$0xff]
    %v658 = vld [vmem:[%s642 + $0x78] sm:$0xff]
    %v659 = vld [vmem:[%s642 + $0x80] sm:$0xff]
    %v660 = vld [vmem:[%s642 + $0x88] sm:$0xff]
    %v661 = vld [vmem:[%s642 + $0x90] sm:$0xff]
    %v662 = vld [vmem:[%s642 + $0x98] sm:$0xff]
    %v663 = vld [vmem:[%s642 + $0xa0] sm:$0xff]
    %v664 = vld [vmem:[%s642 + $0xa8] sm:$0xff]
    %v665 = vld [vmem:[%s642 + $0xb0] sm:$0xff]
    %v666 = vld [vmem:[%s642 + $0xb8] sm:$0xff]
    %v667 = vld [vmem:[%s642 + $0xc0] sm:$0xff]
    %v668 = vld [vmem:[%s642 + $0xc8] sm:$0xff]
    %v669 = vld [vmem:[%s642 + $0xd0] sm:$0xff]
    %v670 = vld [vmem:[%s642 + $0xd8] sm:$0xff]
    %v671 = vld [vmem:[%s642 + $0xe0] sm:$0xff]
    %v672 = vld [vmem:[%s642 + $0xe8] sm:$0xff]
    %v673 = vld [vmem:[%s642 + $0xf0] sm:$0xff]
    %v674 = vld [vmem:[%s642 + $0xf8] sm:$0xff]
    %675 = vmatprep.subr.mxu0 %v644
    %676 = vmatpush1.msra.mxu0 %v643
    %677 = vmatprep.subr.mxu0 %v646
    %678 = vmatpush1.msra.mxu0 %v645
    %679 = vmatprep.subr.mxu0 %v648
    %680 = vmatpush1.msra.mxu0 %v647
    %681 = vmatprep.subr.mxu0 %v650
    %682 = vmatpush1.msra.mxu0 %v649
    %683 = vmatprep.subr.mxu0 %v652
    %684 = vmatpush1.msra.mxu0 %v651
    %685 = vmatprep.subr.mxu0 %v654
    %686 = vmatpush1.msra.mxu0 %v653
    %687 = vmatprep.subr.mxu0 %v656
    %688 = vmatpush1.msra.mxu0 %v655
    %689 = vmatprep.subr.mxu0 %v658
    %690 = vmatpush1.msra.mxu0 %v657
    %691 = vmatprep.subr.mxu0 %v660
    %692 = vmatpush1.msra.mxu0 %v659
    %693 = vmatprep.subr.mxu0 %v662
    %694 = vmatpush1.msra.mxu0 %v661
    %695 = vmatprep.subr.mxu0 %v664
    %696 = vmatpush1.msra.mxu0 %v663
    %697 = vmatprep.subr.mxu0 %v666
    %698 = vmatpush1.msra.mxu0 %v665
    %699 = vmatprep.subr.mxu0 %v668
    %700 = vmatpush1.msra.mxu0 %v667
    %701 = vmatprep.subr.mxu0 %v670
    %702 = vmatpush1.msra.mxu0 %v669
    %703 = vmatprep.subr.mxu0 %v672
    %704 = vmatpush1.msra.mxu0 %v671
    %705 = vmatprep.subr.mxu0 %v674
    %706 = vmatpush1.msra.mxu0 %v673
    %707 = vmatprep.subr.mxu0 0.0
    %708 = vmatpush1.msra.mxu0 0.0
    %709 = vmatprep.subr.mxu0 0.0
    %710 = vmatpush1.msra.mxu0 0.0
    %711 = vmatprep.subr.mxu0 0.0
    %712 = vmatpush1.msra.mxu0 0.0
    %713 = vmatprep.subr.mxu0 0.0
    %714 = vmatpush1.msra.mxu0 0.0
    %715 = vmatprep.subr.mxu0 0.0
    %716 = vmatpush1.msra.mxu0 0.0
    %717 = vmatprep.subr.mxu0 0.0
    %718 = vmatpush1.msra.mxu0 0.0
    %719 = vmatprep.subr.mxu0 0.0
    %720 = vmatpush1.msra.mxu0 0.0
    %721 = vmatprep.subr.mxu0 0.0
    %722 = vmatpush1.msra.mxu0 0.0
    %723 = vmatprep.subr.mxu0 0.0
    %724 = vmatpush1.msra.mxu0 0.0
    %725 = vmatprep.subr.mxu0 0.0
    %726 = vmatpush1.msra.mxu0 0.0
    %727 = vmatprep.subr.mxu0 0.0
    %728 = vmatpush1.msra.mxu0 0.0
    %729 = vmatprep.subr.mxu0 0.0
    %730 = vmatpush1.msra.mxu0 0.0
    %731 = vmatprep.subr.mxu0 0.0
    %732 = vmatpush1.msra.mxu0 0.0
    %733 = vmatprep.subr.mxu0 0.0
    %734 = vmatpush1.msra.mxu0 0.0
    %735 = vmatprep.subr.mxu0 0.0
    %736 = vmatpush1.msra.mxu0 0.0
    %737 = vmatprep.subr.mxu0 0.0
    %738 = vmatpush1.msra.mxu0 0.0
    %739 = vmatprep.mubr.f32.mxu0 0.0
    %740 = vmatmul.mubr.f32.gmra.mrb[0].mxu0 %v56
    %v741 = vpop.f32.mrb[0].mxu0
    %v742 = vadd.f32 0.0, %v741
    %v743 = vpop.f32.mrb[0].mxu0
    %v744 = vadd.f32 0.0, %v743
    %745 = vmatprep.mubr.f32.mxu0 0.0
    %746 = vmatmul.mubr.f32.gmra.mrb[0].mxu0 %v57
    %v747 = vpop.f32.mrb[0].mxu0
    %v748 = vadd.f32 0.0, %v747
    %v749 = vpop.f32.mrb[0].mxu0
    %v750 = vadd.f32 0.0, %v749
    %751 = vmatprep.mubr.f32.mxu0 0.0
    %752 = vmatmul.mubr.f32.gmra.mrb[0].mxu0 %v58
    %v753 = vpop.f32.mrb[0].mxu0
    %v754 = vadd.f32 0.0, %v753
    %v755 = vpop.f32.mrb[0].mxu0
    %v756 = vadd.f32 0.0, %v755
    %757 = vmatprep.mubr.f32.mxu0 0.0
    %758 = vmatmul.mubr.f32.gmra.mrb[0].mxu0 %v59
    %v759 = vpop.f32.mrb[0].mxu0
    %v760 = vadd.f32 0.0, %v759
    %v761 = vpop.f32.mrb[0].mxu0
    %v762 = vadd.f32 0.0, %v761
    %763 = vmatprep.mubr.f32.mxu0 0.0
    %764 = vmatmul.mubr.f32.gmra.mrb[0].mxu0 %v60
    %v765 = vpop.f32.mrb[0].mxu0
    %v766 = vadd.f32 0.0, %v765
    %v767 = vpop.f32.mrb[0].mxu0
    %v768 = vadd.f32 0.0, %v767
    %769 = vmatprep.mubr.f32.mxu0 0.0
    %770 = vmatmul.mubr.f32.gmra.mrb[0].mxu0 %v61
    %v771 = vpop.f32.mrb[0].mxu0
    %v772 = vadd.f32 0.0, %v771
    %v773 = vpop.f32.mrb[0].mxu0
    %v774 = vadd.f32 0.0, %v773
    %775 = vmatprep.mubr.f32.mxu0 0.0
    %776 = vmatmul.mubr.f32.gmra.mrb[0].mxu0 %v62
    %v777 = vpop.f32.mrb[0].mxu0
    %v778 = vadd.f32 0.0, %v777
    %v779 = vpop.f32.mrb[0].mxu0
    %v780 = vadd.f32 0.0, %v779
    %781 = vmatprep.mubr.f32.mxu0 0.0
    %782 = vmatmul.mubr.f32.gmra.mrb[0].mxu0 %v63
    %v783 = vpop.f32.mrb[0].mxu0
    %v784 = vadd.f32 0.0, %v783
    %v785 = vpop.f32.mrb[0].mxu0
    %v786 = vadd.f32 0.0, %v785
    %787 = vmatprep.mubr.f32.mxu0 0.0
    %788 = vmatmul.mubr.f32.gmra.mrb[0].mxu0 %v64
    %v789 = vpop.f32.mrb[0].mxu0
    %v790 = vadd.f32 0.0, %v789
    %v791 = vpop.f32.mrb[0].mxu0
    %v792 = vadd.f32 0.0, %v791
    %793 = vmatprep.mubr.f32.mxu0 0.0
    %794 = vmatmul.mubr.f32.gmra.mrb[0].mxu0 %v65
    %v795 = vpop.f32.mrb[0].mxu0
    %v796 = vadd.f32 0.0, %v795
    %v797 = vpop.f32.mrb[0].mxu0
    %v798 = vadd.f32 0.0, %v797
    %799 = vmatprep.mubr.f32.mxu0 0.0
    %800 = vmatmul.mubr.f32.gmra.mrb[0].mxu0 %v66
    %v801 = vpop.f32.mrb[0].mxu0
    %v802 = vadd.f32 0.0, %v801
    %v803 = vpop.f32.mrb[0].mxu0
    %v804 = vadd.f32 0.0, %v803
    %805 = vmatprep.mubr.f32.mxu0 0.0
    %806 = vmatmul.mubr.f32.gmra.mrb[0].mxu0 %v67
    %v807 = vpop.f32.mrb[0].mxu0
    %v808 = vadd.f32 0.0, %v807
    %v809 = vpop.f32.mrb[0].mxu0
    %v810 = vadd.f32 0.0, %v809
    %811 = vmatprep.mubr.f32.mxu0 0.0
    %812 = vmatmul.mubr.f32.gmra.mrb[0].mxu0 %v68
    %v813 = vpop.f32.mrb[0].mxu0
    %v814 = vadd.f32 0.0, %v813
    %v815 = vpop.f32.mrb[0].mxu0
    %v816 = vadd.f32 0.0, %v815
    %817 = vmatprep.mubr.f32.mxu0 0.0
    %818 = vmatmul.mubr.f32.gmra.mrb[0].mxu0 %v69
    %v819 = vpop.f32.mrb[0].mxu0
    %v820 = vadd.f32 0.0, %v819
    %v821 = vpop.f32.mrb[0].mxu0
    %v822 = vadd.f32 0.0, %v821
    %823 = vmatprep.mubr.f32.mxu0 0.0
    %824 = vmatmul.mubr.f32.gmra.mrb[0].mxu0 %v70
    %v825 = vpop.f32.mrb[0].mxu0
    %v826 = vadd.f32 0.0, %v825
    %v827 = vpop.f32.mrb[0].mxu0
    %v828 = vadd.f32 0.0, %v827
    %829 = vmatprep.mubr.f32.mxu0 0.0
    %830 = vmatmul.mubr.f32.gmra.mrb[0].mxu0 %v71
    %v831 = vpop.f32.mrb[0].mxu0
    %v832 = vadd.f32 0.0, %v831
    %v833 = vpop.f32.mrb[0].mxu0
    %v834 = vadd.f32 0.0, %v833
    %835 = vmatprep.mubr.f32.mxu0 0.0
    %836 = vmatmul.mubr.f32.gmra.mrb[0].mxu0 %v72
    %v837 = vpop.f32.mrb[0].mxu0
    %v838 = vadd.f32 0.0, %v837
    %v839 = vpop.f32.mrb[0].mxu0
    %v840 = vadd.f32 0.0, %v839
    %841 = vmatprep.mubr.f32.mxu0 0.0
    %842 = vmatmul.mubr.f32.gmra.mrb[0].mxu0 %v73
    %v843 = vpop.f32.mrb[0].mxu0
    %v844 = vadd.f32 0.0, %v843
    %v845 = vpop.f32.mrb[0].mxu0
    %v846 = vadd.f32 0.0, %v845
    %847 = vmatprep.mubr.f32.mxu0 0.0
    %848 = vmatmul.mubr.f32.gmra.mrb[0].mxu0 %v74
    %v849 = vpop.f32.mrb[0].mxu0
    %v850 = vadd.f32 0.0, %v849
    %v851 = vpop.f32.mrb[0].mxu0
    %v852 = vadd.f32 0.0, %v851
    %853 = vmatprep.mubr.f32.mxu0 0.0
    %854 = vmatmul.mubr.f32.gmra.mrb[0].mxu0 %v75
    %v855 = vpop.f32.mrb[0].mxu0
    %v856 = vadd.f32 0.0, %v855
    %v857 = vpop.f32.mrb[0].mxu0
    %v858 = vadd.f32 0.0, %v857
    %859 = vmatprep.mubr.f32.mxu0 0.0
    %860 = vmatmul.mubr.f32.gmra.mrb[0].mxu0 %v76
    %v861 = vpop.f32.mrb[0].mxu0
    %v862 = vadd.f32 0.0, %v861
    %v863 = vpop.f32.mrb[0].mxu0
    %v864 = vadd.f32 0.0, %v863
    %865 = vmatprep.mubr.f32.mxu0 0.0
    %866 = vmatmul.mubr.f32.gmra.mrb[0].mxu0 %v77
    %v867 = vpop.f32.mrb[0].mxu0
    %v868 = vadd.f32 0.0, %v867
    %v869 = vpop.f32.mrb[0].mxu0
    %v870 = vadd.f32 0.0, %v869
    %871 = vmatprep.mubr.f32.mxu0 0.0
    %872 = vmatmul.mubr.f32.gmra.mrb[0].mxu0 %v78
    %v873 = vpop.f32.mrb[0].mxu0
    %v874 = vadd.f32 0.0, %v873
    %v875 = vpop.f32.mrb[0].mxu0
    %v876 = vadd.f32 0.0, %v875
    %877 = vmatprep.mubr.f32.mxu0 0.0
    %878 = vmatmul.mubr.f32.gmra.mrb[0].mxu0 %v79
    %v879 = vpop.f32.mrb[0].mxu0
    %v880 = vadd.f32 0.0, %v879
    %v881 = vpop.f32.mrb[0].mxu0
    %v882 = vadd.f32 0.0, %v881
    %883 = vmatprep.mubr.f32.mxu0 0.0
    %884 = vmatmul.mubr.f32.gmra.mrb[0].mxu0 %v80
    %v885 = vpop.f32.mrb[0].mxu0
    %v886 = vadd.f32 0.0, %v885
    %v887 = vpop.f32.mrb[0].mxu0
    %v888 = vadd.f32 0.0, %v887
    %889 = vmatprep.mubr.f32.mxu0 0.0
    %890 = vmatmul.mubr.f32.gmra.mrb[0].mxu0 %v81
    %v891 = vpop.f32.mrb[0].mxu0
    %v892 = vadd.f32 0.0, %v891
    %v893 = vpop.f32.mrb[0].mxu0
    %v894 = vadd.f32 0.0, %v893
    %895 = vmatprep.mubr.f32.mxu0 0.0
    %896 = vmatmul.mubr.f32.gmra.mrb[0].mxu0 %v82
    %v897 = vpop.f32.mrb[0].mxu0
    %v898 = vadd.f32 0.0, %v897
    %v899 = vpop.f32.mrb[0].mxu0
    %v900 = vadd.f32 0.0, %v899
    %901 = vmatprep.mubr.f32.mxu0 0.0
    %902 = vmatmul.mubr.f32.gmra.mrb[0].mxu0 %v83
    %v903 = vpop.f32.mrb[0].mxu0
    %v904 = vadd.f32 0.0, %v903
    %v905 = vpop.f32.mrb[0].mxu0
    %v906 = vadd.f32 0.0, %v905
    %907 = vmatprep.mubr.f32.mxu0 0.0
    %908 = vmatmul.mubr.f32.gmra.mrb[0].mxu0 %v84
    %v909 = vpop.f32.mrb[0].mxu0
    %v910 = vadd.f32 0.0, %v909
    %v911 = vpop.f32.mrb[0].mxu0
    %v912 = vadd.f32 0.0, %v911
    %913 = vmatprep.mubr.f32.mxu0 0.0
    %914 = vmatmul.mubr.f32.gmra.mrb[0].mxu0 %v85
    %v915 = vpop.f32.mrb[0].mxu0
    %v916 = vadd.f32 0.0, %v915
    %v917 = vpop.f32.mrb[0].mxu0
    %v918 = vadd.f32 0.0, %v917
    %919 = vmatprep.mubr.f32.mxu0 0.0
    %920 = vmatmul.mubr.f32.gmra.mrb[0].mxu0 %v86
    %v921 = vpop.f32.mrb[0].mxu0
    %v922 = vadd.f32 0.0, %v921
    %v923 = vpop.f32.mrb[0].mxu0
    %v924 = vadd.f32 0.0, %v923
    %925 = vmatprep.mubr.f32.mxu0 0.0
    %926 = vmatmul.mubr.f32.gmra.mrb[0].mxu0 %v87
    %v927 = vpop.f32.mrb[0].mxu0
    %v928 = vadd.f32 0.0, %v927
    %v929 = vpop.f32.mrb[0].mxu0
    %v930 = vadd.f32 0.0, %v929
    %931 = vdwg.mxu0
    %s932 = scalar_lea.vmem [#allocation7], 512
    %v933 = vld [vmem:[%s932] sm:$0xff]
    %v934 = vld [vmem:[%s932 + $0x8] sm:$0xff]
    %v935 = vld [vmem:[%s932 + $0x10] sm:$0xff]
    %v936 = vld [vmem:[%s932 + $0x18] sm:$0xff]
    %v937 = vld [vmem:[%s932 + $0x20] sm:$0xff]
    %v938 = vld [vmem:[%s932 + $0x28] sm:$0xff]
    %v939 = vld [vmem:[%s932 + $0x30] sm:$0xff]
    %v940 = vld [vmem:[%s932 + $0x38] sm:$0xff]
    %v941 = vld [vmem:[%s932 + $0x40] sm:$0xff]
    %v942 = vld [vmem:[%s932 + $0x48] sm:$0xff]
    %v943 = vld [vmem:[%s932 + $0x50] sm:$0xff]
    %v944 = vld [vmem:[%s932 + $0x58] sm:$0xff]
    %v945 = vld [vmem:[%s932 + $0x60] sm:$0xff]
    %v946 = vld [vmem:[%s932 + $0x68] sm:$0xff]
    %v947 = vld [vmem:[%s932 + $0x70] sm:$0xff]
    %v948 = vld [vmem:[%s932 + $0x78] sm:$0xff]
    %v949 = vld [vmem:[%s932 + $0x80] sm:$0xff]
    %v950 = vld [vmem:[%s932 + $0x88] sm:$0xff]
    %v951 = vld [vmem:[%s932 + $0x90] sm:$0xff]
    %v952 = vld [vmem:[%s932 + $0x98] sm:$0xff]
    %v953 = vld [vmem:[%s932 + $0xa0] sm:$0xff]
    %v954 = vld [vmem:[%s932 + $0xa8] sm:$0xff]
    %v955 = vld [vmem:[%s932 + $0xb0] sm:$0xff]
    %v956 = vld [vmem:[%s932 + $0xb8] sm:$0xff]
    %v957 = vld [vmem:[%s932 + $0xc0] sm:$0xff]
    %v958 = vld [vmem:[%s932 + $0xc8] sm:$0xff]
    %v959 = vld [vmem:[%s932 + $0xd0] sm:$0xff]
    %v960 = vld [vmem:[%s932 + $0xd8] sm:$0xff]
    %v961 = vld [vmem:[%s932 + $0xe0] sm:$0xff]
    %v962 = vld [vmem:[%s932 + $0xe8] sm:$0xff]
    %v963 = vld [vmem:[%s932 + $0xf0] sm:$0xff]
    %v964 = vld [vmem:[%s932 + $0xf8] sm:$0xff]
    %v965 = vld [vmem:[%s932 + $0x100] sm:$0xff]
    %v966 = vld [vmem:[%s932 + $0x108] sm:$0xff]
    %v967 = vld [vmem:[%s932 + $0x110] sm:$0xff]
    %v968 = vld [vmem:[%s932 + $0x118] sm:$0xff]
    %v969 = vld [vmem:[%s932 + $0x120] sm:$0xff]
    %v970 = vld [vmem:[%s932 + $0x128] sm:$0xff]
    %v971 = vld [vmem:[%s932 + $0x130] sm:$0xff]
    %v972 = vld [vmem:[%s932 + $0x138] sm:$0xff]
    %v973 = vld [vmem:[%s932 + $0x140] sm:$0xff]
    %v974 = vld [vmem:[%s932 + $0x148] sm:$0xff]
    %v975 = vld [vmem:[%s932 + $0x150] sm:$0xff]
    %v976 = vld [vmem:[%s932 + $0x158] sm:$0xff]
    %v977 = vld [vmem:[%s932 + $0x160] sm:$0xff]
    %v978 = vld [vmem:[%s932 + $0x168] sm:$0xff]
    %v979 = vld [vmem:[%s932 + $0x170] sm:$0xff]
    %v980 = vld [vmem:[%s932 + $0x178] sm:$0xff]
    %v981 = vld [vmem:[%s932 + $0x180] sm:$0xff]
    %v982 = vld [vmem:[%s932 + $0x188] sm:$0xff]
    %v983 = vld [vmem:[%s932 + $0x190] sm:$0xff]
    %v984 = vld [vmem:[%s932 + $0x198] sm:$0xff]
    %v985 = vld [vmem:[%s932 + $0x1a0] sm:$0xff]
    %v986 = vld [vmem:[%s932 + $0x1a8] sm:$0xff]
    %v987 = vld [vmem:[%s932 + $0x1b0] sm:$0xff]
    %v988 = vld [vmem:[%s932 + $0x1b8] sm:$0xff]
    %v989 = vld [vmem:[%s932 + $0x1c0] sm:$0xff]
    %v990 = vld [vmem:[%s932 + $0x1c8] sm:$0xff]
    %v991 = vld [vmem:[%s932 + $0x1d0] sm:$0xff]
    %v992 = vld [vmem:[%s932 + $0x1d8] sm:$0xff]
    %v993 = vld [vmem:[%s932 + $0x1e0] sm:$0xff]
    %v994 = vld [vmem:[%s932 + $0x1e8] sm:$0xff]
    %v995 = vld [vmem:[%s932 + $0x1f0] sm:$0xff]
    %v996 = vld [vmem:[%s932 + $0x1f8] sm:$0xff]
    %v997 = vsub.f32 %v742, %v933
    %v998 = vsub.f32 %v744, %v934
    %v999 = vsub.f32 %v748, %v935
    %v1000 = vsub.f32 %v750, %v936
    %v1001 = vsub.f32 %v754, %v937
    %v1002 = vsub.f32 %v756, %v938
    %v1003 = vsub.f32 %v760, %v939
    %v1004 = vsub.f32 %v762, %v940
    %v1005 = vsub.f32 %v766, %v941
    %v1006 = vsub.f32 %v768, %v942
    %v1007 = vsub.f32 %v772, %v943
    %v1008 = vsub.f32 %v774, %v944
    %v1009 = vsub.f32 %v778, %v945
    %v1010 = vsub.f32 %v780, %v946
    %v1011 = vsub.f32 %v784, %v947
    %v1012 = vsub.f32 %v786, %v948
    %v1013 = vsub.f32 %v790, %v949
    %v1014 = vsub.f32 %v792, %v950
    %v1015 = vsub.f32 %v796, %v951
    %v1016 = vsub.f32 %v798, %v952
    %v1017 = vsub.f32 %v802, %v953
    %v1018 = vsub.f32 %v804, %v954
    %v1019 = vsub.f32 %v808, %v955
    %v1020 = vsub.f32 %v810, %v956
    %v1021 = vsub.f32 %v814, %v957
    %v1022 = vsub.f32 %v816, %v958
    %v1023 = vsub.f32 %v820, %v959
    %v1024 = vsub.f32 %v822, %v960
    %v1025 = vsub.f32 %v826, %v961
    %v1026 = vsub.f32 %v828, %v962
    %v1027 = vsub.f32 %v832, %v963
    %v1028 = vsub.f32 %v834, %v964
    %v1029 = vsub.f32 %v838, %v965
    %v1030 = vsub.f32 %v840, %v966
    %v1031 = vsub.f32 %v844, %v967
    %v1032 = vsub.f32 %v846, %v968
    %v1033 = vsub.f32 %v850, %v969
    %v1034 = vsub.f32 %v852, %v970
    %v1035 = vsub.f32 %v856, %v971
    %v1036 = vsub.f32 %v858, %v972
    %v1037 = vsub.f32 %v862, %v973
    %v1038 = vsub.f32 %v864, %v974
    %v1039 = vsub.f32 %v868, %v975
    %v1040 = vsub.f32 %v870, %v976
    %v1041 = vsub.f32 %v874, %v977
    %v1042 = vsub.f32 %v876, %v978
    %v1043 = vsub.f32 %v880, %v979
    %v1044 = vsub.f32 %v882, %v980
    %v1045 = vsub.f32 %v886, %v981
    %v1046 = vsub.f32 %v888, %v982
    %v1047 = vsub.f32 %v892, %v983
    %v1048 = vsub.f32 %v894, %v984
    %v1049 = vsub.f32 %v898, %v985
    %v1050 = vsub.f32 %v900, %v986
    %v1051 = vsub.f32 %v904, %v987
    %v1052 = vsub.f32 %v906, %v988
    %v1053 = vsub.f32 %v910, %v989
    %v1054 = vsub.f32 %v912, %v990
    %v1055 = vsub.f32 %v916, %v991
    %v1056 = vsub.f32 %v918, %v992
    %v1057 = vsub.f32 %v922, %v993
    %v1058 = vsub.f32 %v924, %v994
    %v1059 = vsub.f32 %v928, %v995
    %v1060 = vsub.f32 %v930, %v996
    %v1061 = vmul.f32 %v997, %v997
    %v1062 = vmul.f32 %v998, %v998
    %v1063 = vmul.f32 %v999, %v999
    %v1064 = vmul.f32 %v1000, %v1000
    %v1065 = vmul.f32 %v1001, %v1001
    %v1066 = vmul.f32 %v1002, %v1002
    %v1067 = vmul.f32 %v1003, %v1003
    %v1068 = vmul.f32 %v1004, %v1004
    %v1069 = vmul.f32 %v1005, %v1005
    %v1070 = vmul.f32 %v1006, %v1006
    %v1071 = vmul.f32 %v1007, %v1007
    %v1072 = vmul.f32 %v1008, %v1008
    %v1073 = vmul.f32 %v1009, %v1009
    %v1074 = vmul.f32 %v1010, %v1010
    %v1075 = vmul.f32 %v1011, %v1011
    %v1076 = vmul.f32 %v1012, %v1012
    %v1077 = vmul.f32 %v1013, %v1013
    %v1078 = vmul.f32 %v1014, %v1014
    %v1079 = vmul.f32 %v1015, %v1015
    %v1080 = vmul.f32 %v1016, %v1016
    %v1081 = vmul.f32 %v1017, %v1017
    %v1082 = vmul.f32 %v1018, %v1018
    %v1083 = vmul.f32 %v1019, %v1019
    %v1084 = vmul.f32 %v1020, %v1020
    %v1085 = vmul.f32 %v1021, %v1021
    %v1086 = vmul.f32 %v1022, %v1022
    %v1087 = vmul.f32 %v1023, %v1023
    %v1088 = vmul.f32 %v1024, %v1024
    %v1089 = vmul.f32 %v1025, %v1025
    %v1090 = vmul.f32 %v1026, %v1026
    %v1091 = vmul.f32 %v1027, %v1027
    %v1092 = vmul.f32 %v1028, %v1028
    %v1093 = vmul.f32 %v1029, %v1029
    %v1094 = vmul.f32 %v1030, %v1030
    %v1095 = vmul.f32 %v1031, %v1031
    %v1096 = vmul.f32 %v1032, %v1032
    %v1097 = vmul.f32 %v1033, %v1033
    %v1098 = vmul.f32 %v1034, %v1034
    %v1099 = vmul.f32 %v1035, %v1035
    %v1100 = vmul.f32 %v1036, %v1036
    %v1101 = vmul.f32 %v1037, %v1037
    %v1102 = vmul.f32 %v1038, %v1038
    %v1103 = vmul.f32 %v1039, %v1039
    %v1104 = vmul.f32 %v1040, %v1040
    %v1105 = vmul.f32 %v1041, %v1041
    %v1106 = vmul.f32 %v1042, %v1042
    %v1107 = vmul.f32 %v1043, %v1043
    %v1108 = vmul.f32 %v1044, %v1044
    %v1109 = vmul.f32 %v1045, %v1045
    %v1110 = vmul.f32 %v1046, %v1046
    %v1111 = vmul.f32 %v1047, %v1047
    %v1112 = vmul.f32 %v1048, %v1048
    %v1113 = vmul.f32 %v1049, %v1049
    %v1114 = vmul.f32 %v1050, %v1050
    %v1115 = vmul.f32 %v1051, %v1051
    %v1116 = vmul.f32 %v1052, %v1052
    %v1117 = vmul.f32 %v1053, %v1053
    %v1118 = vmul.f32 %v1054, %v1054
    %v1119 = vmul.f32 %v1055, %v1055
    %v1120 = vmul.f32 %v1056, %v1056
    %v1121 = vmul.f32 %v1057, %v1057
    %v1122 = vmul.f32 %v1058, %v1058
    %v1123 = vmul.f32 %v1059, %v1059
    %v1124 = vmul.f32 %v1060, %v1060
    %v1125 = vadd.f32 %v1061, %v1062
    %v1126 = vadd.f32 %v1125, %v1063
    %v1127 = vadd.f32 %v1126, %v1064
    %v1128 = vadd.f32 %v1127, %v1065
    %v1129 = vadd.f32 %v1128, %v1066
    %v1130 = vadd.f32 %v1129, %v1067
    %v1131 = vadd.f32 %v1130, %v1068
    %v1132 = vadd.f32 %v1131, %v1069
    %v1133 = vadd.f32 %v1132, %v1070
    %v1134 = vadd.f32 %v1133, %v1071
    %v1135 = vadd.f32 %v1134, %v1072
    %v1136 = vadd.f32 %v1135, %v1073
    %v1137 = vadd.f32 %v1136, %v1074
    %v1138 = vadd.f32 %v1137, %v1075
    %v1139 = vadd.f32 %v1138, %v1076
    %v1140 = vadd.f32 %v1139, %v1077
    %v1141 = vadd.f32 %v1140, %v1078
    %v1142 = vadd.f32 %v1141, %v1079
    %v1143 = vadd.f32 %v1142, %v1080
    %v1144 = vadd.f32 %v1143, %v1081
    %v1145 = vadd.f32 %v1144, %v1082
    %v1146 = vadd.f32 %v1145, %v1083
    %v1147 = vadd.f32 %v1146, %v1084
    %v1148 = vadd.f32 %v1147, %v1085
    %v1149 = vadd.f32 %v1148, %v1086
    %v1150 = vadd.f32 %v1149, %v1087
    %v1151 = vadd.f32 %v1150, %v1088
    %v1152 = vadd.f32 %v1151, %v1089
    %v1153 = vadd.f32 %v1152, %v1090
    %v1154 = vadd.f32 %v1153, %v1091
    %v1155 = vadd.f32 %v1154, %v1092
    %v1156 = vadd.f32 %v1155, %v1093
    %v1157 = vadd.f32 %v1156, %v1094
    %v1158 = vadd.f32 %v1157, %v1095
    %v1159 = vadd.f32 %v1158, %v1096
    %v1160 = vadd.f32 %v1159, %v1097
    %v1161 = vadd.f32 %v1160, %v1098
    %v1162 = vadd.f32 %v1161, %v1099
    %v1163 = vadd.f32 %v1162, %v1100
    %v1164 = vadd.f32 %v1163, %v1101
    %v1165 = vadd.f32 %v1164, %v1102
    %v1166 = vadd.f32 %v1165, %v1103
    %v1167 = vadd.f32 %v1166, %v1104
    %v1168 = vadd.f32 %v1167, %v1105
    %v1169 = vadd.f32 %v1168, %v1106
    %v1170 = vadd.f32 %v1169, %v1107
    %v1171 = vadd.f32 %v1170, %v1108
    %v1172 = vadd.f32 %v1171, %v1109
    %v1173 = vadd.f32 %v1172, %v1110
    %v1174 = vadd.f32 %v1173, %v1111
    %v1175 = vadd.f32 %v1174, %v1112
    %v1176 = vadd.f32 %v1175, %v1113
    %v1177 = vadd.f32 %v1176, %v1114
    %v1178 = vadd.f32 %v1177, %v1115
    %v1179 = vadd.f32 %v1178, %v1116
    %v1180 = vadd.f32 %v1179, %v1117
    %v1181 = vadd.f32 %v1180, %v1118
    %v1182 = vadd.f32 %v1181, %v1119
    %v1183 = vadd.f32 %v1182, %v1120
    %v1184 = vadd.f32 %v1183, %v1121
    %v1185 = vadd.f32 %v1184, %v1122
    %v1186 = vadd.f32 %v1185, %v1123
    %v1187 = vadd.f32 %v1186, %v1124
    %1188 = vadd.xlane.f32.xlu0 %v1187
    %v1189 = vpop.xlane.xlu0 %1188
    %v1190 = vrot.slane %v1189, 4
    %v1191 = vadd.f32 %v1189, %v1190
    %v1192 = vrot.slane %v1191, 2
    %v1193 = vadd.f32 %v1191, %v1192
    %v1194 = vrot.slane %v1193, 1
    %v1195 = vadd.f32 %v1193, %v1194
    %s1196 = vtos %v1195
    %s1197 = sadd.f32 %s641, %s1196
    %v1198 = vstv %s1197
    %v1199 = vadd.f32 %v1198, 0.0
    %1200 = vst [vmem:[#allocation8] sm:$0xff] %v1199
    // Predicated region
    $region26: #{tpu_custom_call.1} parent=1 // pred_check
      _
    $region27: #{tpu_custom_call.1} parent=1 // pred_check_branch
      %1202 = sbr.rel (0) target = $region29
    $region28: #{tpu_custom_call.1} parent=1 // pred_region
      %s1204 = ssub.s32 128, 128
      %1205 = vsyncadd [#allocation4], %s1204
      %s1207 = sshll.u32 [#allocation8], 4
      %s1208 = int_to_ptr.vmem [resolvable:$true] %s1207
      %1210 = dma.vmem_to_hbm [thread:$0]  %s1208, 128, %s3, [#allocation4]
    $region29: #{tpu_custom_call.1} parent=1 // pred_fallthru
      _
    // Predicated region
    $region30: #{tpu_custom_call.1} parent=1 // pred_check
      _
    $region31: #{tpu_custom_call.1} parent=1 // pred_check_branch
      %1212 = sbr.rel (0) target = $region33
    $region32: #{tpu_custom_call.1} parent=1 // pred_region
      %1213 = dma.done [#allocation4], 128
    $region33: #{tpu_custom_call.1} parent=1 // pred_fallthru
      _
    %1214 = vsyncpa [#allocation3], 1
    %1215 = vsyncpa [#allocation6], 1
    %1216 = vsyncpa [#allocation4], 1

</llo_original>
